<compile_context>
chip_gen: v6e
topology: v6e:2x2x1
jax: 0.10.0
libtpu: 0.0.40
codegen_flags: <defaults>
</compile_context>

<pallas_src>
import functools

import jax
import jax.numpy as jnp
from jax.experimental import pallas as pl
from jax.experimental.pallas import tpu as pltpu

BN_EPS = 1e-5
LANE = 128


def _round_up(x, m):
    return (x + m - 1) // m * m


def _lane_pad(dim):
    # 128-align always; 256-align when the 128-rounded size is already >= 256
    # so v6e/v7x 256x256 MXU tiles are fully fed (256 is also fine on v5e).
    r = _round_up(dim, LANE)
    return _round_up(dim, 2 * LANE) if r >= 2 * LANE else r


def _physical_vmem_bytes():
    try:
        info = pltpu.get_tpu_info()
        for attr in ("vmem_capacity_bytes", "vmem_size_bytes", "vmem_bytes"):
            val = getattr(info, attr, None)
            if val:
                return int(val)
    except Exception:
        pass
    return 64 << 20  # conservative fallback: v7x has 64 MiB per TensorCore


# --------------------------------------------------------------------------
# Kernel 1: conv-as-matmul + per-tile partial BN statistics.  grid = (Mt,).
# --------------------------------------------------------------------------
def _conv_stats_kernel(patches_ref, w_ref, y_ref, psum_ref, psumsq_ref):
    y = jnp.dot(patches_ref[...], w_ref[...],
                preferred_element_type=jnp.float32)            # (tm, Cpad) f32
    y_ref[...] = y
    tm, cpad = y.shape
    # Partial sums kept as (8, Cpad) sublane blocks: only VPU adds here; the
    # final 8-row cross-sublane reduce happens once in the wrapper.
    y3 = y.reshape(tm // 8, 8, cpad)
    psum_ref[...] = jnp.sum(y3, axis=0, keepdims=True)          # (1, 8, Cpad)
    psumsq_ref[...] = jnp.sum(y3 * y3, axis=0, keepdims=True)   # (1, 8, Cpad)


# --------------------------------------------------------------------------
# Kernel 2: folded BN epilogue, in-place over y (aliased).  grid = (Mt,).
# --------------------------------------------------------------------------
def _bn_apply_kernel(y_ref, scale_ref, shift_ref, o_ref):
    o_ref[...] = y_ref[...] * scale_ref[...] + shift_ref[...]


def _im2col_nhwc(x_nhwc, kh, kw, padding, dilation):
    """(N, H, W, Cin) -> (N*Ho*Wo, kh*kw*Cin); stride fixed to 1 (see note)."""
    n, h, w, cin = x_nhwc.shape
    xp = jnp.pad(x_nhwc, ((0, 0), (padding, padding), (padding, padding), (0, 0)))
    eff_kh = dilation * (kh - 1) + 1
    eff_kw = dilation * (kw - 1) + 1
    ho = h + 2 * padding - eff_kh + 1   # stride is always 1 (see module note)
    wo = w + 2 * padding - eff_kw + 1
    cols = [xp[:, i * dilation:i * dilation + ho, j * dilation:j * dilation + wo, :]
            for i in range(kh) for j in range(kw)]
    patches = jnp.concatenate(cols, axis=-1)                    # (N, Ho, Wo, kh*kw*Cin)
    return patches.reshape(n * ho * wo, kh * kw * cin), ho, wo


@functools.partial(jax.jit, static_argnames=("padding", "dilation"))
def conv_bn(x_nchw, weight, gamma, beta, *, padding=0, dilation=1):
    """x_nchw: (N, Cin, H, W); weight: (Cout, Cin, kh, kw); gamma/beta: (Cout,)."""
    n, cin, h, w = x_nchw.shape
    cout, cin_w, kh, kw = weight.shape
    assert cin == cin_w, "groups != 1 not supported"  # TODO(synk): grouped conv

    # bf16 im2col built directly (MXU operand dtype): halves the wrapper-side
    # HBM intermediate vs building it in f32 and casting afterwards.
    # TODO(synk): in-kernel shifted-window im2col to avoid this intermediate.
    x_nhwc = jnp.transpose(x_nchw, (0, 2, 3, 1)).astype(jnp.bfloat16)
    patches, ho, wo = _im2col_nhwc(x_nhwc, kh, kw, padding, dilation)   # (M, K) bf16
    m, k = patches.shape

    kpad = _lane_pad(k)
    cpad = _lane_pad(cout)

    phys_vmem = _physical_vmem_bytes()
    # ~72% of physical VMEM leaves headroom for Mosaic's internal buffers:
    # <=~46 MiB on v7x (64 MiB/TC), <=~92 MiB on v5e/v6e (128 MiB).
    vmem_cap = int(phys_vmem * 0.72)

    def _tile_bytes(tm_):
        return (2 * tm_ * kpad * 2          # double-buffered bf16 patch tiles
                + 2 * tm_ * cpad * 4        # double-buffered f32 y tiles
                + 2 * kpad * cpad * 2       # resident weight (constant index)
                + 4 * 8 * cpad * 4          # per-tile stats blocks
                + (1 << 20))                # slack

    m8 = _round_up(m, 8)
    tm = 8
    for cand in (1024, 512, 256, 128, 64, 32, 16, 8):
        if cand >= 2 * m8 and cand > 8:
            continue                         # don't over-pad tiny problems
        if _tile_bytes(cand) <= vmem_cap:
            tm = cand
            break
    mpad = _round_up(m, tm)
    mt = mpad // tm

    # Zero-padding: padded M rows and padded Cout columns contribute exactly 0
    # to the BN sums, and the mean/var divide uses the true M, so the stats
    # are unbiased by padding.
    patches_p = jnp.pad(patches, ((0, mpad - m), (0, kpad - k)))
    # (Cout, Cin, kh, kw) -> (kh, kw, Cin, Cout) -> (K, Cout): matches im2col order.
    w2d = jnp.transpose(weight, (2, 3, 1, 0)).reshape(k, cout).astype(jnp.bfloat16)
    w_p = jnp.pad(w2d, ((0, kpad - k), (0, cpad - cout)))

    # -------------------- call 1: matmul + partial stats --------------------
    vmem_limit1 = int(min(max(_tile_bytes(tm), 8 << 20), vmem_cap))
    flops1 = 2 * mpad * kpad * cpad
    bytes1 = (mpad * kpad * 2 + kpad * cpad * 2
              + mpad * cpad * 4 + 2 * mt * 8 * cpad * 4)

    # TODO(synk): pipeline_mode=pl.Buffered(1) on the constant-index weight
    # spec (saves one kpad*cpad bf16 buffer) once verified on all generations.
    y_p, psum, psumsq = pl.pallas_call(
        _conv_stats_kernel,
        out_shape=(
            jax.ShapeDtypeStruct((mpad, cpad), jnp.float32),
            jax.ShapeDtypeStruct((mt, 8, cpad), jnp.float32),
            jax.ShapeDtypeStruct((mt, 8, cpad), jnp.float32),
        ),
        grid_spec=pltpu.PrefetchScalarGridSpec(
            num_scalar_prefetch=0,
            grid=(mt,),
            in_specs=[
                pl.BlockSpec((tm, kpad), lambda i: (i, 0)),
                pl.BlockSpec((kpad, cpad), lambda i: (0, 0)),
            ],
            out_specs=[
                pl.BlockSpec((tm, cpad), lambda i: (i, 0)),
                pl.BlockSpec((1, 8, cpad), lambda i: (i, 0, 0)),
                pl.BlockSpec((1, 8, cpad), lambda i: (i, 0, 0)),
            ]),
        compiler_params=pltpu.CompilerParams(
            dimension_semantics=("parallel",),      # no cross-tile carries
            vmem_limit_bytes=vmem_limit1),
        cost_estimate=pl.CostEstimate(
            flops=flops1, transcendentals=0, bytes_accessed=bytes1),
    )(patches_p, w_p)

    # ------------- tiny BN fold (mean, var, gamma, beta) -> (scale, shift) --
    total_sum = jnp.sum(psum, axis=(0, 1))           # (Cpad,)
    total_sumsq = jnp.sum(psumsq, axis=(0, 1))       # (Cpad,)
    mean = total_sum / float(m)
    # TODO(synk): Welford / shifted accumulation if |mean| >> std ever bites.
    var = jnp.maximum(total_sumsq / float(m) - mean * mean, 0.0)
    inv_std = jax.lax.rsqrt(var + BN_EPS)
    gamma_p = jnp.pad(gamma.astype(jnp.float32), (0, cpad - cout))
    beta_p = jnp.pad(beta.astype(jnp.float32), (0, cpad - cout))
    scale = (gamma_p * inv_std).reshape(1, cpad)
    shift = (beta_p - mean * gamma_p * inv_std).reshape(1, cpad)

    # -------------------- call 2: folded FMA epilogue (in place) ------------
    vmem_limit2 = int(min(max(4 * tm * cpad * 4 + (2 << 20), 8 << 20), vmem_cap))
    out_p = pl.pallas_call(
        _bn_apply_kernel,
        out_shape=jax.ShapeDtypeStruct((mpad, cpad), jnp.float32),
        grid_spec=pltpu.PrefetchScalarGridSpec(
            num_scalar_prefetch=0,
            grid=(mt,),
            in_specs=[
                pl.BlockSpec((tm, cpad), lambda i: (i, 0)),
                pl.BlockSpec((1, cpad), lambda i: (0, 0)),
                pl.BlockSpec((1, cpad), lambda i: (0, 0)),
            ],
            out_specs=pl.BlockSpec((tm, cpad), lambda i: (i, 0))),
        compiler_params=pltpu.CompilerParams(
            dimension_semantics=("parallel",),
            vmem_limit_bytes=vmem_limit2),
        cost_estimate=pl.CostEstimate(
            flops=2 * mpad * cpad, transcendentals=0,
            bytes_accessed=2 * mpad * cpad * 4),
        input_output_aliases={0: 0},   # reuse y's HBM buffer for the output
    )(y_p, scale, shift)

    out = out_p[:m, :cout].reshape(n, ho, wo, cout)
    return jnp.transpose(out, (0, 3, 1, 2))  # back to NCHW


if __name__ == "__main__":
    # Conv_BN(in_channels=4, out_channels=8, kernel_size=3, padding=1)
    key = jax.random.PRNGKey(0)
    kx, kw_, kg, kb = jax.random.split(key, 4)

    N, CIN, H, W = 2, 4, 16, 16
    COUT, KH, KW = 8, 3, 3
    PADDING, DILATION = 1, 1

    x = jax.random.normal(kx, (N, CIN, H, W), dtype=jnp.float32)
    fan_in = CIN * KH * KW
    weight = jax.random.uniform(
        kw_, (COUT, CIN, KH, KW), dtype=jnp.float32,
        minval=-1.0 / jnp.sqrt(fan_in), maxval=1.0 / jnp.sqrt(fan_in))
    gamma = 1.0 + 0.1 * jax.random.normal(kg, (COUT,), dtype=jnp.float32)
    beta = 0.1 * jax.random.normal(kb, (COUT,), dtype=jnp.float32)

    out = conv_bn(x, weight, gamma, beta, padding=PADDING, dilation=DILATION)
    jax.block_until_ready(out)
    assert out.shape == (N, COUT, H, W), out.shape

    # Tolerance check vs a plain-JAX reference (bf16 MXU operands => not bitwise).
    y_ref = jax.lax.conv_general_dilated(
        x, weight, window_strides=(1, 1),
        padding=((PADDING, PADDING), (PADDING, PADDING)),
        rhs_dilation=(DILATION, DILATION),
        dimension_numbers=("NCHW", "OIHW", "NCHW"))
    mu = y_ref.mean(axis=(0, 2, 3), keepdims=True)
    va = y_ref.var(axis=(0, 2, 3), keepdims=True)
    ref = ((y_ref - mu) * jax.lax.rsqrt(va + BN_EPS)
           * gamma.reshape(1, -1, 1, 1) + beta.reshape(1, -1, 1, 1))
    err = float(jnp.max(jnp.abs(out - ref)))
    assert err < 5e-2, f"max abs err {err}"

    print("KERNEL_OK")
</pallas_src>

<mosaic_0001>
module attributes {stable_mosaic.version = 11 : i64} {
  func.func @_conv_stats_kernel(%arg0: i32, %arg1: memref<512x128xbf16, #tpu.memory_space<vmem>>, %arg2: memref<128x128xbf16, #tpu.memory_space<vmem>>, %arg3: memref<512x128xf32, #tpu.memory_space<vmem>>, %arg4: memref<1x8x128xf32, #tpu.memory_space<vmem>>, %arg5: memref<1x8x128xf32, #tpu.memory_space<vmem>>) attributes {dimension_semantics = [#tpu.dimension_semantics<parallel>], iteration_bounds = array<i64: 1>, scalar_prefetch = 0 : i64, scratch_operands = 0 : i64, tpu.core_type = #tpu.core_type<tc>, window_params = [{transform_indices = @transform_0, window_bounds = array<i64: 512, 128>}, {pipeline_mode = #tpu.pipeline_mode<synchronous>, transform_indices = @transform_1, window_bounds = array<i64: 128, 128>}, {transform_indices = @transform_2, window_bounds = array<i64: 512, 128>}, {transform_indices = @transform_3, window_bounds = array<i64: 1, 8, 128>}, {transform_indices = @transform_4, window_bounds = array<i64: 1, 8, 128>}]} {
    %c0 = arith.constant 0 : index
    %c0_0 = arith.constant 0 : index
    %0 = vector.load %arg1[%c0, %c0_0] : memref<512x128xbf16, #tpu.memory_space<vmem>>, vector<512x128xbf16>
    %c0_1 = arith.constant 0 : index
    %c0_2 = arith.constant 0 : index
    %1 = vector.load %arg2[%c0_1, %c0_2] : memref<128x128xbf16, #tpu.memory_space<vmem>>, vector<128x128xbf16>
    %cst = arith.constant dense<0.000000e+00> : vector<512x128xf32>
    %2 = tpu.matmul %0, %1, %cst {dimension_numbers = #tpu.dot_dimension_numbers<[1], [0], [0], [1], [0, 0, 1, 1], [], []>} : vector<512x128xbf16>, vector<128x128xbf16>, vector<512x128xf32> -> vector<512x128xf32>
    %c0_3 = arith.constant 0 : index
    %c0_4 = arith.constant 0 : index
    %3 = vector.load %arg3[%c0_3, %c0_4] : memref<512x128xf32, #tpu.memory_space<vmem>>, vector<512x128xf32>
    tpu.vector_store %arg3[%c0_3, %c0_4], %2 {strides = array<i32>} : memref<512x128xf32, #tpu.memory_space<vmem>>, vector<512x128xf32>,
    %4 = vector.shape_cast %2 : vector<512x128xf32> to vector<64x8x128xf32>
    %cst_5 = arith.constant dense<0.000000e+00> : vector<8x128xf32>
    %5 = vector.multi_reduction <add>, %4, %cst_5 [0] : vector<64x8x128xf32> to vector<8x128xf32>
    %6 = vector.shape_cast %5 : vector<8x128xf32> to vector<1x8x128xf32>
    %c0_6 = arith.constant 0 : index
    %c0_7 = arith.constant 0 : index
    %c0_8 = arith.constant 0 : index
    %7 = vector.load %arg4[%c0_6, %c0_7, %c0_8] : memref<1x8x128xf32, #tpu.memory_space<vmem>>, vector<1x8x128xf32>
    tpu.vector_store %arg4[%c0_6, %c0_7, %c0_8], %6 {strides = array<i32>} : memref<1x8x128xf32, #tpu.memory_space<vmem>>, vector<1x8x128xf32>,
    %8 = arith.mulf %4, %4 : vector<64x8x128xf32>
    %cst_9 = arith.constant dense<0.000000e+00> : vector<8x128xf32>
    %9 = vector.multi_reduction <add>, %8, %cst_9 [0] : vector<64x8x128xf32> to vector<8x128xf32>
    %10 = vector.shape_cast %9 : vector<8x128xf32> to vector<1x8x128xf32>
    %c0_10 = arith.constant 0 : index
    %c0_11 = arith.constant 0 : index
    %c0_12 = arith.constant 0 : index
    %11 = vector.load %arg5[%c0_10, %c0_11, %c0_12] : memref<1x8x128xf32, #tpu.memory_space<vmem>>, vector<1x8x128xf32>
    tpu.vector_store %arg5[%c0_10, %c0_11, %c0_12], %10 {strides = array<i32>} : memref<1x8x128xf32, #tpu.memory_space<vmem>>, vector<1x8x128xf32>,
    return
  }
  func.func @transform_0(%arg0: i32) -> (i32, i32) {
    %c0_i32 = arith.constant 0 : i32
    %c0_i32_0 = arith.constant 0 : i32
    return %arg0, %c0_i32 : i32, i32
  }
  func.func @transform_1(%arg0: i32) -> (i32, i32) {
    %c0_i32 = arith.constant 0 : i32
    %c0_i32_0 = arith.constant 0 : i32
    %c0_i32_1 = arith.constant 0 : i32
    return %c0_i32, %c0_i32_0 : i32, i32
  }
  func.func @transform_2(%arg0: i32) -> (i32, i32) {
    %c0_i32 = arith.constant 0 : i32
    %c0_i32_0 = arith.constant 0 : i32
    return %arg0, %c0_i32 : i32, i32
  }
  func.func @transform_3(%arg0: i32) -> (i32, i32, i32) {
    %c0_i32 = arith.constant 0 : i32
    %c0_i32_0 = arith.constant 0 : i32
    %c0_i32_1 = arith.constant 0 : i32
    return %arg0, %c0_i32, %c0_i32_0 : i32, i32, i32
  }
  func.func @transform_4(%arg0: i32) -> (i32, i32, i32) {
    %c0_i32 = arith.constant 0 : i32
    %c0_i32_0 = arith.constant 0 : i32
    %c0_i32_1 = arith.constant 0 : i32
    return %arg0, %c0_i32, %c0_i32_0 : i32, i32, i32
  }
}

module attributes {stable_mosaic.version = 11 : i64} {
  func.func @_bn_apply_kernel(%arg0: i32, %arg1: memref<512x128xf32, #tpu.memory_space<vmem>>, %arg2: memref<1x128xf32, #tpu.memory_space<vmem>>, %arg3: memref<1x128xf32, #tpu.memory_space<vmem>>, %arg4: memref<512x128xf32, #tpu.memory_space<vmem>>) attributes {dimension_semantics = [#tpu.dimension_semantics<parallel>], iteration_bounds = array<i64: 1>, scalar_prefetch = 0 : i64, scratch_operands = 0 : i64, tpu.core_type = #tpu.core_type<tc>, window_params = [{transform_indices = @transform_0, window_bounds = array<i64: 512, 128>}, {pipeline_mode = #tpu.pipeline_mode<synchronous>, transform_indices = @transform_1, window_bounds = array<i64: 1, 128>}, {pipeline_mode = #tpu.pipeline_mode<synchronous>, transform_indices = @transform_2, window_bounds = array<i64: 1, 128>}, {transform_indices = @transform_3, window_bounds = array<i64: 512, 128>}]} {
    %c0 = arith.constant 0 : index
    %c0_0 = arith.constant 0 : index
    %0 = vector.load %arg1[%c0, %c0_0] : memref<512x128xf32, #tpu.memory_space<vmem>>, vector<512x128xf32>
    %c0_1 = arith.constant 0 : index
    %c0_2 = arith.constant 0 : index
    %1 = vector.load %arg2[%c0_1, %c0_2] : memref<1x128xf32, #tpu.memory_space<vmem>>, vector<1x128xf32>
    %2 = vector.broadcast %1 : vector<1x128xf32> to vector<512x128xf32>
    %3 = arith.mulf %0, %2 : vector<512x128xf32>
    %c0_3 = arith.constant 0 : index
    %c0_4 = arith.constant 0 : index
    %4 = vector.load %arg3[%c0_3, %c0_4] : memref<1x128xf32, #tpu.memory_space<vmem>>, vector<1x128xf32>
    %5 = vector.broadcast %4 : vector<1x128xf32> to vector<512x128xf32>
    %6 = arith.addf %3, %5 : vector<512x128xf32>
    %c0_5 = arith.constant 0 : index
    %c0_6 = arith.constant 0 : index
    %7 = vector.load %arg4[%c0_5, %c0_6] : memref<512x128xf32, #tpu.memory_space<vmem>>, vector<512x128xf32>
    tpu.vector_store %arg4[%c0_5, %c0_6], %6 {strides = array<i32>} : memref<512x128xf32, #tpu.memory_space<vmem>>, vector<512x128xf32>,
    return
  }
  func.func @transform_0(%arg0: i32) -> (i32, i32) {
    %c0_i32 = arith.constant 0 : i32
    %c0_i32_0 = arith.constant 0 : i32
    return %arg0, %c0_i32 : i32, i32
  }
  func.func @transform_1(%arg0: i32) -> (i32, i32) {
    %c0_i32 = arith.constant 0 : i32
    %c0_i32_0 = arith.constant 0 : i32
    %c0_i32_1 = arith.constant 0 : i32
    return %c0_i32, %c0_i32_0 : i32, i32
  }
  func.func @transform_2(%arg0: i32) -> (i32, i32) {
    %c0_i32 = arith.constant 0 : i32
    %c0_i32_0 = arith.constant 0 : i32
    %c0_i32_1 = arith.constant 0 : i32
    return %c0_i32, %c0_i32_0 : i32, i32
  }
  func.func @transform_3(%arg0: i32) -> (i32, i32) {
    %c0_i32 = arith.constant 0 : i32
    %c0_i32_0 = arith.constant 0 : i32
    return %arg0, %c0_i32 : i32, i32
  }
}

</mosaic_0001>

<llo_original>
// kernel: conv_bn.3
$region0: #{conv_bn.3}
  #allocation0 [shape = 'u32[]', space=smem, size = 0x4, offset = 0x4, fixed_abs, tag = 'smem constant byte address 0x4 - core index']
  #allocation1 [shape = 'u32[144,128]{1,0:T(1,128)}', space=vmem, size = 0x12000, scoped, tag = 'internal scratch']
  %s0 = inlined_call_operand.vmem [shape: f32[512,128], index: 0, kind: input, shape index: {}, may-alias: {0,3}]
  %s1 = inlined_call_operand.vmem [shape: f32[1,128], index: 1, kind: input, shape index: {}]
  %s2 = inlined_call_operand.vmem [shape: f32[1,128], index: 2, kind: input, shape index: {}]
  %s3 = inlined_call_operand.vmem [shape: f32[512,128], index: 3, kind: output, shape index: {}, may-alias: {0,3}]
  %s4 = sld [smem:[#allocation0]]
  $region22: #{conv_bn.3} parent=0
    _
  %s6 = ssub.s32 1, %s4
  %s7 = scalar_select 0, %s6, %s4
  // Predicated region
  $region2: #{conv_bn.3} parent=0 // pred_check
    _
  $region3: #{conv_bn.3} parent=0 // pred_check_branch
    %9 = sbr.rel (0) target = $region5
  $region4: #{conv_bn.3} parent=0 // pred_region
    _
  $region5: #{conv_bn.3} parent=0 // pred_fallthru
    _
  // Predicated region
  $region6: #{conv_bn.3} parent=0 // pred_check
    _
  $region7: #{conv_bn.3} parent=0 // pred_check_branch
    %11 = sbr.rel (0) target = $region9
  $region8: #{conv_bn.3} parent=0 // pred_region
    _
  $region9: #{conv_bn.3} parent=0 // pred_fallthru
    _
  // Predicated region
  $region10: #{conv_bn.3} parent=0 // pred_check
    _
  $region11: #{conv_bn.3} parent=0 // pred_check_branch
    %13 = sbr.rel (0) target = $region13
  $region12: #{conv_bn.3} parent=0 // pred_region
    _
  $region13: #{conv_bn.3} parent=0 // pred_fallthru
    _
  %v14 = vld [vmem:[%s0] sm:$0xff]
  %v15 = vld [vmem:[%s0 + $0x8] sm:$0xff]
  %v16 = vld [vmem:[%s0 + $0x10] sm:$0xff]
  %v17 = vld [vmem:[%s0 + $0x18] sm:$0xff]
  %v18 = vld [vmem:[%s0 + $0x20] sm:$0xff]
  %v19 = vld [vmem:[%s0 + $0x28] sm:$0xff]
  %v20 = vld [vmem:[%s0 + $0x30] sm:$0xff]
  %v21 = vld [vmem:[%s0 + $0x38] sm:$0xff]
  %v22 = vld [vmem:[%s0 + $0x40] sm:$0xff]
  %v23 = vld [vmem:[%s0 + $0x48] sm:$0xff]
  %v24 = vld [vmem:[%s0 + $0x50] sm:$0xff]
  %v25 = vld [vmem:[%s0 + $0x58] sm:$0xff]
  %v26 = vld [vmem:[%s0 + $0x60] sm:$0xff]
  %v27 = vld [vmem:[%s0 + $0x68] sm:$0xff]
  %v28 = vld [vmem:[%s0 + $0x70] sm:$0xff]
  %v29 = vld [vmem:[%s0 + $0x78] sm:$0xff]
  %v30 = vld [vmem:[%s0 + $0x80] sm:$0xff]
  %v31 = vld [vmem:[%s0 + $0x88] sm:$0xff]
  %v32 = vld [vmem:[%s0 + $0x90] sm:$0xff]
  %v33 = vld [vmem:[%s0 + $0x98] sm:$0xff]
  %v34 = vld [vmem:[%s0 + $0xa0] sm:$0xff]
  %v35 = vld [vmem:[%s0 + $0xa8] sm:$0xff]
  %v36 = vld [vmem:[%s0 + $0xb0] sm:$0xff]
  %v37 = vld [vmem:[%s0 + $0xb8] sm:$0xff]
  %v38 = vld [vmem:[%s0 + $0xc0] sm:$0xff]
  %v39 = vld [vmem:[%s0 + $0xc8] sm:$0xff]
  %v40 = vld [vmem:[%s0 + $0xd0] sm:$0xff]
  %v41 = vld [vmem:[%s0 + $0xd8] sm:$0xff]
  %v42 = vld [vmem:[%s0 + $0xe0] sm:$0xff]
  %v43 = vld [vmem:[%s0 + $0xe8] sm:$0xff]
  %v44 = vld [vmem:[%s0 + $0xf0] sm:$0xff]
  %v45 = vld [vmem:[%s0 + $0xf8] sm:$0xff]
  %v46 = vld [vmem:[%s0 + $0x100] sm:$0xff]
  %v47 = vld [vmem:[%s0 + $0x108] sm:$0xff]
  %v48 = vld [vmem:[%s0 + $0x110] sm:$0xff]
  %v49 = vld [vmem:[%s0 + $0x118] sm:$0xff]
  %v50 = vld [vmem:[%s0 + $0x120] sm:$0xff]
  %v51 = vld [vmem:[%s0 + $0x128] sm:$0xff]
  %v52 = vld [vmem:[%s0 + $0x130] sm:$0xff]
  %v53 = vld [vmem:[%s0 + $0x138] sm:$0xff]
  %v54 = vld [vmem:[%s0 + $0x140] sm:$0xff]
  %v55 = vld [vmem:[%s0 + $0x148] sm:$0xff]
  %v56 = vld [vmem:[%s0 + $0x150] sm:$0xff]
  %v57 = vld [vmem:[%s0 + $0x158] sm:$0xff]
  %v58 = vld [vmem:[%s0 + $0x160] sm:$0xff]
  %v59 = vld [vmem:[%s0 + $0x168] sm:$0xff]
  %v60 = vld [vmem:[%s0 + $0x170] sm:$0xff]
  %v61 = vld [vmem:[%s0 + $0x178] sm:$0xff]
  %v62 = vld [vmem:[%s0 + $0x180] sm:$0xff]
  %v63 = vld [vmem:[%s0 + $0x188] sm:$0xff]
  %v64 = vld [vmem:[%s0 + $0x190] sm:$0xff]
  %v65 = vld [vmem:[%s0 + $0x198] sm:$0xff]
  %v66 = vld [vmem:[%s0 + $0x1a0] sm:$0xff]
  %v67 = vld [vmem:[%s0 + $0x1a8] sm:$0xff]
  %v68 = vld [vmem:[%s0 + $0x1b0] sm:$0xff]
  %v69 = vld [vmem:[%s0 + $0x1b8] sm:$0xff]
  %v70 = vld [vmem:[%s0 + $0x1c0] sm:$0xff]
  %v71 = vld [vmem:[%s0 + $0x1c8] sm:$0xff]
  %v72 = vld [vmem:[%s0 + $0x1d0] sm:$0xff]
  %v73 = vld [vmem:[%s0 + $0x1d8] sm:$0xff]
  %v74 = vld [vmem:[%s0 + $0x1e0] sm:$0xff]
  %v75 = vld [vmem:[%s0 + $0x1e8] sm:$0xff]
  %v76 = vld [vmem:[%s0 + $0x1f0] sm:$0xff]
  %v77 = vld [vmem:[%s0 + $0x1f8] sm:$0xff]
  %v78 = vld [vmem:[%s1] sm:$0x1]
  %v80 = vlaneseq
  %v81 = vshrl.u32 %v80, 7
  %v82 = vsub.s32 0, %v81
  %v83 = vrot.slane %v78, %v82
  %v85 = vmul.f32 %v14, %v83
  %v86 = vmul.f32 %v15, %v83
  %v87 = vmul.f32 %v16, %v83
  %v88 = vmul.f32 %v17, %v83
  %v89 = vmul.f32 %v18, %v83
  %v90 = vmul.f32 %v19, %v83
  %v91 = vmul.f32 %v20, %v83
  %v92 = vmul.f32 %v21, %v83
  %v93 = vmul.f32 %v22, %v83
  %v94 = vmul.f32 %v23, %v83
  %v95 = vmul.f32 %v24, %v83
  %v96 = vmul.f32 %v25, %v83
  %v97 = vmul.f32 %v26, %v83
  %v98 = vmul.f32 %v27, %v83
  %v99 = vmul.f32 %v28, %v83
  %v100 = vmul.f32 %v29, %v83
  %v101 = vmul.f32 %v30, %v83
  %v102 = vmul.f32 %v31, %v83
  %v103 = vmul.f32 %v32, %v83
  %v104 = vmul.f32 %v33, %v83
  %v105 = vmul.f32 %v34, %v83
  %v106 = vmul.f32 %v35, %v83
  %v107 = vmul.f32 %v36, %v83
  %v108 = vmul.f32 %v37, %v83
  %v109 = vmul.f32 %v38, %v83
  %v110 = vmul.f32 %v39, %v83
  %v111 = vmul.f32 %v40, %v83
  %v112 = vmul.f32 %v41, %v83
  %v113 = vmul.f32 %v42, %v83
  %v114 = vmul.f32 %v43, %v83
  %v115 = vmul.f32 %v44, %v83
  %v116 = vmul.f32 %v45, %v83
  %v117 = vmul.f32 %v46, %v83
  %v118 = vmul.f32 %v47, %v83
  %v119 = vmul.f32 %v48, %v83
  %v120 = vmul.f32 %v49, %v83
  %v121 = vmul.f32 %v50, %v83
  %v122 = vmul.f32 %v51, %v83
  %v123 = vmul.f32 %v52, %v83
  %v124 = vmul.f32 %v53, %v83
  %v125 = vmul.f32 %v54, %v83
  %v126 = vmul.f32 %v55, %v83
  %v127 = vmul.f32 %v56, %v83
  %v128 = vmul.f32 %v57, %v83
  %v129 = vmul.f32 %v58, %v83
  %v130 = vmul.f32 %v59, %v83
  %v131 = vmul.f32 %v60, %v83
  %v132 = vmul.f32 %v61, %v83
  %v133 = vmul.f32 %v62, %v83
  %v134 = vmul.f32 %v63, %v83
  %v135 = vmul.f32 %v64, %v83
  %v136 = vmul.f32 %v65, %v83
  %v137 = vmul.f32 %v66, %v83
  %v138 = vmul.f32 %v67, %v83
  %v139 = vmul.f32 %v68, %v83
  %v140 = vmul.f32 %v69, %v83
  %v141 = vmul.f32 %v70, %v83
  %v142 = vmul.f32 %v71, %v83
  %v143 = vmul.f32 %v72, %v83
  %v144 = vmul.f32 %v73, %v83
  %v145 = vmul.f32 %v74, %v83
  %v146 = vmul.f32 %v75, %v83
  %v147 = vmul.f32 %v76, %v83
  %v148 = vmul.f32 %v77, %v83
  %v149 = vld [vmem:[%s2] sm:$0x1]
  %v151 = vlaneseq
  %v152 = vshrl.u32 %v151, 7
  %v153 = vsub.s32 0, %v152
  %v154 = vrot.slane %v149, %v153
  %v156 = vadd.f32 %v85, %v154
  %v157 = vadd.f32 %v86, %v154
  %v158 = vadd.f32 %v87, %v154
  %v159 = vadd.f32 %v88, %v154
  %v160 = vadd.f32 %v89, %v154
  %v161 = vadd.f32 %v90, %v154
  %v162 = vadd.f32 %v91, %v154
  %v163 = vadd.f32 %v92, %v154
  %v164 = vadd.f32 %v93, %v154
  %v165 = vadd.f32 %v94, %v154
  %v166 = vadd.f32 %v95, %v154
  %v167 = vadd.f32 %v96, %v154
  %v168 = vadd.f32 %v97, %v154
  %v169 = vadd.f32 %v98, %v154
  %v170 = vadd.f32 %v99, %v154
  %v171 = vadd.f32 %v100, %v154
  %v172 = vadd.f32 %v101, %v154
  %v173 = vadd.f32 %v102, %v154
  %v174 = vadd.f32 %v103, %v154
  %v175 = vadd.f32 %v104, %v154
  %v176 = vadd.f32 %v105, %v154
  %v177 = vadd.f32 %v106, %v154
  %v178 = vadd.f32 %v107, %v154
  %v179 = vadd.f32 %v108, %v154
  %v180 = vadd.f32 %v109, %v154
  %v181 = vadd.f32 %v110, %v154
  %v182 = vadd.f32 %v111, %v154
  %v183 = vadd.f32 %v112, %v154
  %v184 = vadd.f32 %v113, %v154
  %v185 = vadd.f32 %v114, %v154
  %v186 = vadd.f32 %v115, %v154
  %v187 = vadd.f32 %v116, %v154
  %v188 = vadd.f32 %v117, %v154
  %v189 = vadd.f32 %v118, %v154
  %v190 = vadd.f32 %v119, %v154
  %v191 = vadd.f32 %v120, %v154
  %v192 = vadd.f32 %v121, %v154
  %v193 = vadd.f32 %v122, %v154
  %v194 = vadd.f32 %v123, %v154
  %v195 = vadd.f32 %v124, %v154
  %v196 = vadd.f32 %v125, %v154
  %v197 = vadd.f32 %v126, %v154
  %v198 = vadd.f32 %v127, %v154
  %v199 = vadd.f32 %v128, %v154
  %v200 = vadd.f32 %v129, %v154
  %v201 = vadd.f32 %v130, %v154
  %v202 = vadd.f32 %v131, %v154
  %v203 = vadd.f32 %v132, %v154
  %v204 = vadd.f32 %v133, %v154
  %v205 = vadd.f32 %v134, %v154
  %v206 = vadd.f32 %v135, %v154
  %v207 = vadd.f32 %v136, %v154
  %v208 = vadd.f32 %v137, %v154
  %v209 = vadd.f32 %v138, %v154
  %v210 = vadd.f32 %v139, %v154
  %v211 = vadd.f32 %v140, %v154
  %v212 = vadd.f32 %v141, %v154
  %v213 = vadd.f32 %v142, %v154
  %v214 = vadd.f32 %v143, %v154
  %v215 = vadd.f32 %v144, %v154
  %v216 = vadd.f32 %v145, %v154
  %v217 = vadd.f32 %v146, %v154
  %v218 = vadd.f32 %v147, %v154
  %v219 = vadd.f32 %v148, %v154
  %220 = vst [vmem:[%s3] sm:$0xff] %v156
  %221 = vst [vmem:[%s3 + $0x8] sm:$0xff] %v157
  %222 = vst [vmem:[%s3 + $0x10] sm:$0xff] %v158
  %223 = vst [vmem:[%s3 + $0x18] sm:$0xff] %v159
  %224 = vst [vmem:[%s3 + $0x20] sm:$0xff] %v160
  %225 = vst [vmem:[%s3 + $0x28] sm:$0xff] %v161
  %226 = vst [vmem:[%s3 + $0x30] sm:$0xff] %v162
  %227 = vst [vmem:[%s3 + $0x38] sm:$0xff] %v163
  %228 = vst [vmem:[%s3 + $0x40] sm:$0xff] %v164
  %229 = vst [vmem:[%s3 + $0x48] sm:$0xff] %v165
  %230 = vst [vmem:[%s3 + $0x50] sm:$0xff] %v166
  %231 = vst [vmem:[%s3 + $0x58] sm:$0xff] %v167
  %232 = vst [vmem:[%s3 + $0x60] sm:$0xff] %v168
  %233 = vst [vmem:[%s3 + $0x68] sm:$0xff] %v169
  %234 = vst [vmem:[%s3 + $0x70] sm:$0xff] %v170
  %235 = vst [vmem:[%s3 + $0x78] sm:$0xff] %v171
  %236 = vst [vmem:[%s3 + $0x80] sm:$0xff] %v172
  %237 = vst [vmem:[%s3 + $0x88] sm:$0xff] %v173
  %238 = vst [vmem:[%s3 + $0x90] sm:$0xff] %v174
  %239 = vst [vmem:[%s3 + $0x98] sm:$0xff] %v175
  %240 = vst [vmem:[%s3 + $0xa0] sm:$0xff] %v176
  %241 = vst [vmem:[%s3 + $0xa8] sm:$0xff] %v177
  %242 = vst [vmem:[%s3 + $0xb0] sm:$0xff] %v178
  %243 = vst [vmem:[%s3 + $0xb8] sm:$0xff] %v179
  %244 = vst [vmem:[%s3 + $0xc0] sm:$0xff] %v180
  %245 = vst [vmem:[%s3 + $0xc8] sm:$0xff] %v181
  %246 = vst [vmem:[%s3 + $0xd0] sm:$0xff] %v182
  %247 = vst [vmem:[%s3 + $0xd8] sm:$0xff] %v183
  %248 = vst [vmem:[%s3 + $0xe0] sm:$0xff] %v184
  %249 = vst [vmem:[%s3 + $0xe8] sm:$0xff] %v185
  %250 = vst [vmem:[%s3 + $0xf0] sm:$0xff] %v186
  %251 = vst [vmem:[%s3 + $0xf8] sm:$0xff] %v187
  %252 = vst [vmem:[%s3 + $0x100] sm:$0xff] %v188
  %253 = vst [vmem:[%s3 + $0x108] sm:$0xff] %v189
  %254 = vst [vmem:[%s3 + $0x110] sm:$0xff] %v190
  %255 = vst [vmem:[%s3 + $0x118] sm:$0xff] %v191
  %256 = vst [vmem:[%s3 + $0x120] sm:$0xff] %v192
  %257 = vst [vmem:[%s3 + $0x128] sm:$0xff] %v193
  %258 = vst [vmem:[%s3 + $0x130] sm:$0xff] %v194
  %259 = vst [vmem:[%s3 + $0x138] sm:$0xff] %v195
  %260 = vst [vmem:[%s3 + $0x140] sm:$0xff] %v196
  %261 = vst [vmem:[%s3 + $0x148] sm:$0xff] %v197
  %262 = vst [vmem:[%s3 + $0x150] sm:$0xff] %v198
  %263 = vst [vmem:[%s3 + $0x158] sm:$0xff] %v199
  %264 = vst [vmem:[%s3 + $0x160] sm:$0xff] %v200
  %265 = vst [vmem:[%s3 + $0x168] sm:$0xff] %v201
  %266 = vst [vmem:[%s3 + $0x170] sm:$0xff] %v202
  %267 = vst [vmem:[%s3 + $0x178] sm:$0xff] %v203
  %268 = vst [vmem:[%s3 + $0x180] sm:$0xff] %v204
  %269 = vst [vmem:[%s3 + $0x188] sm:$0xff] %v205
  %270 = vst [vmem:[%s3 + $0x190] sm:$0xff] %v206
  %271 = vst [vmem:[%s3 + $0x198] sm:$0xff] %v207
  %272 = vst [vmem:[%s3 + $0x1a0] sm:$0xff] %v208
  %273 = vst [vmem:[%s3 + $0x1a8] sm:$0xff] %v209
  %274 = vst [vmem:[%s3 + $0x1b0] sm:$0xff] %v210
  %275 = vst [vmem:[%s3 + $0x1b8] sm:$0xff] %v211
  %276 = vst [vmem:[%s3 + $0x1c0] sm:$0xff] %v212
  %277 = vst [vmem:[%s3 + $0x1c8] sm:$0xff] %v213
  %278 = vst [vmem:[%s3 + $0x1d0] sm:$0xff] %v214
  %279 = vst [vmem:[%s3 + $0x1d8] sm:$0xff] %v215
  %280 = vst [vmem:[%s3 + $0x1e0] sm:$0xff] %v216
  %281 = vst [vmem:[%s3 + $0x1e8] sm:$0xff] %v217
  %282 = vst [vmem:[%s3 + $0x1f0] sm:$0xff] %v218
  %283 = vst [vmem:[%s3 + $0x1f8] sm:$0xff] %v219
  // Predicated region
  $region14: #{conv_bn.3} parent=0 // pred_check
    _
  $region15: #{conv_bn.3} parent=0 // pred_check_branch
    %285 = sbr.rel (0) target = $region17
  $region16: #{conv_bn.3} parent=0 // pred_region
    _
  $region17: #{conv_bn.3} parent=0 // pred_fallthru
    _
  // Predicated region
  $region18: #{conv_bn.3} parent=0 // pred_check
    _
  $region19: #{conv_bn.3} parent=0 // pred_check_branch
    %287 = sbr.rel (0) target = $region21
  $region20: #{conv_bn.3} parent=0 // pred_region
    _
  $region21: #{conv_bn.3} parent=0 // pred_fallthru
    _

// kernel: conv_bn.2
$region0: #{conv_bn.2}
  #allocation0 [shape = 'u32[]', space=smem, size = 0x4, offset = 0x4, fixed_abs, tag = 'smem constant byte address 0x4 - core index']
  #allocation1 [shape = 'u32[144,128]{1,0:T(1,128)}', space=vmem, size = 0x12000, scoped, tag = 'internal scratch']
  %s0 = inlined_call_operand.vmem [shape: bf16[512,128], index: 0, kind: input, shape index: {}]
  %s1 = inlined_call_operand.vmem [shape: bf16[128,128], index: 1, kind: input, shape index: {}]
  %s2 = inlined_call_operand.vmem [shape: f32[512,128], index: 2, kind: output, shape index: {0}]
  %s3 = inlined_call_operand.vmem [shape: f32[1,8,128], index: 3, kind: output, shape index: {1}]
  %s4 = inlined_call_operand.vmem [shape: f32[1,8,128], index: 4, kind: output, shape index: {2}]
  %5 = xla_tuple %s2, %s3, %s4
  %s6 = sld [smem:[#allocation0]]
  $region34: #{conv_bn.2} parent=0
    _
  %s8 = ssub.s32 1, %s6
  %s9 = scalar_select 0, %s8, %s6
  // Predicated region
  $region2: #{conv_bn.2} parent=0 // pred_check
    _
  $region3: #{conv_bn.2} parent=0 // pred_check_branch
    %11 = sbr.rel (0) target = $region5
  $region4: #{conv_bn.2} parent=0 // pred_region
    _
  $region5: #{conv_bn.2} parent=0 // pred_fallthru
    _
  // Predicated region
  $region6: #{conv_bn.2} parent=0 // pred_check
    _
  $region7: #{conv_bn.2} parent=0 // pred_check_branch
    %13 = sbr.rel (0) target = $region9
  $region8: #{conv_bn.2} parent=0 // pred_region
    _
  $region9: #{conv_bn.2} parent=0 // pred_fallthru
    _
  %v15 = vld [vmem:[%s0] sm:$0xf]
  %v16 = vld [vmem:[%s0 + $0x4] sm:$0xf]
  %v17 = vld [vmem:[%s0 + $0x8] sm:$0xf]
  %v18 = vld [vmem:[%s0 + $0xc] sm:$0xf]
  %v19 = vld [vmem:[%s0 + $0x10] sm:$0xf]
  %v20 = vld [vmem:[%s0 + $0x14] sm:$0xf]
  %v21 = vld [vmem:[%s0 + $0x18] sm:$0xf]
  %v22 = vld [vmem:[%s0 + $0x1c] sm:$0xf]
  %v23 = vld [vmem:[%s0 + $0x20] sm:$0xf]
  %v24 = vld [vmem:[%s0 + $0x24] sm:$0xf]
  %v25 = vld [vmem:[%s0 + $0x28] sm:$0xf]
  %v26 = vld [vmem:[%s0 + $0x2c] sm:$0xf]
  %v27 = vld [vmem:[%s0 + $0x30] sm:$0xf]
  %v28 = vld [vmem:[%s0 + $0x34] sm:$0xf]
  %v29 = vld [vmem:[%s0 + $0x38] sm:$0xf]
  %v30 = vld [vmem:[%s0 + $0x3c] sm:$0xf]
  %v31 = vld [vmem:[%s0 + $0x40] sm:$0xf]
  %v32 = vld [vmem:[%s0 + $0x44] sm:$0xf]
  %v33 = vld [vmem:[%s0 + $0x48] sm:$0xf]
  %v34 = vld [vmem:[%s0 + $0x4c] sm:$0xf]
  %v35 = vld [vmem:[%s0 + $0x50] sm:$0xf]
  %v36 = vld [vmem:[%s0 + $0x54] sm:$0xf]
  %v37 = vld [vmem:[%s0 + $0x58] sm:$0xf]
  %v38 = vld [vmem:[%s0 + $0x5c] sm:$0xf]
  %v39 = vld [vmem:[%s0 + $0x60] sm:$0xf]
  %v40 = vld [vmem:[%s0 + $0x64] sm:$0xf]
  %v41 = vld [vmem:[%s0 + $0x68] sm:$0xf]
  %v42 = vld [vmem:[%s0 + $0x6c] sm:$0xf]
  %v43 = vld [vmem:[%s0 + $0x70] sm:$0xf]
  %v44 = vld [vmem:[%s0 + $0x74] sm:$0xf]
  %v45 = vld [vmem:[%s0 + $0x78] sm:$0xf]
  %v46 = vld [vmem:[%s0 + $0x7c] sm:$0xf]
  %v47 = vld [vmem:[%s0 + $0x80] sm:$0xf]
  %v48 = vld [vmem:[%s0 + $0x84] sm:$0xf]
  %v49 = vld [vmem:[%s0 + $0x88] sm:$0xf]
  %v50 = vld [vmem:[%s0 + $0x8c] sm:$0xf]
  %v51 = vld [vmem:[%s0 + $0x90] sm:$0xf]
  %v52 = vld [vmem:[%s0 + $0x94] sm:$0xf]
  %v53 = vld [vmem:[%s0 + $0x98] sm:$0xf]
  %v54 = vld [vmem:[%s0 + $0x9c] sm:$0xf]
  %v55 = vld [vmem:[%s0 + $0xa0] sm:$0xf]
  %v56 = vld [vmem:[%s0 + $0xa4] sm:$0xf]
  %v57 = vld [vmem:[%s0 + $0xa8] sm:$0xf]
  %v58 = vld [vmem:[%s0 + $0xac] sm:$0xf]
  %v59 = vld [vmem:[%s0 + $0xb0] sm:$0xf]
  %v60 = vld [vmem:[%s0 + $0xb4] sm:$0xf]
  %v61 = vld [vmem:[%s0 + $0xb8] sm:$0xf]
  %v62 = vld [vmem:[%s0 + $0xbc] sm:$0xf]
  %v63 = vld [vmem:[%s0 + $0xc0] sm:$0xf]
  %v64 = vld [vmem:[%s0 + $0xc4] sm:$0xf]
  %v65 = vld [vmem:[%s0 + $0xc8] sm:$0xf]
  %v66 = vld [vmem:[%s0 + $0xcc] sm:$0xf]
  %v67 = vld [vmem:[%s0 + $0xd0] sm:$0xf]
  %v68 = vld [vmem:[%s0 + $0xd4] sm:$0xf]
  %v69 = vld [vmem:[%s0 + $0xd8] sm:$0xf]
  %v70 = vld [vmem:[%s0 + $0xdc] sm:$0xf]
  %v71 = vld [vmem:[%s0 + $0xe0] sm:$0xf]
  %v72 = vld [vmem:[%s0 + $0xe4] sm:$0xf]
  %v73 = vld [vmem:[%s0 + $0xe8] sm:$0xf]
  %v74 = vld [vmem:[%s0 + $0xec] sm:$0xf]
  %v75 = vld [vmem:[%s0 + $0xf0] sm:$0xf]
  %v76 = vld [vmem:[%s0 + $0xf4] sm:$0xf]
  %v77 = vld [vmem:[%s0 + $0xf8] sm:$0xf]
  %v78 = vld [vmem:[%s0 + $0xfc] sm:$0xf]
  %v79 = vld [vmem:[%s1] sm:$0xf]
  %v80 = vld [vmem:[%s1 + $0x4] sm:$0xf]
  %v81 = vld [vmem:[%s1 + $0x8] sm:$0xf]
  %v82 = vld [vmem:[%s1 + $0xc] sm:$0xf]
  %v83 = vld [vmem:[%s1 + $0x10] sm:$0xf]
  %v84 = vld [vmem:[%s1 + $0x14] sm:$0xf]
  %v85 = vld [vmem:[%s1 + $0x18] sm:$0xf]
  %v86 = vld [vmem:[%s1 + $0x1c] sm:$0xf]
  %v87 = vld [vmem:[%s1 + $0x20] sm:$0xf]
  %v88 = vld [vmem:[%s1 + $0x24] sm:$0xf]
  %v89 = vld [vmem:[%s1 + $0x28] sm:$0xf]
  %v90 = vld [vmem:[%s1 + $0x2c] sm:$0xf]
  %v91 = vld [vmem:[%s1 + $0x30] sm:$0xf]
  %v92 = vld [vmem:[%s1 + $0x34] sm:$0xf]
  %v93 = vld [vmem:[%s1 + $0x38] sm:$0xf]
  %v94 = vld [vmem:[%s1 + $0x3c] sm:$0xf]
  %v159 = vunpack.c.l.b16 %v15
  %v160 = vunpack.c.l.b16 %v16
  %v161 = vunpack.c.l.b16 %v17
  %v162 = vunpack.c.l.b16 %v18
  %v163 = vunpack.c.l.b16 %v19
  %v164 = vunpack.c.l.b16 %v20
  %v165 = vunpack.c.l.b16 %v21
  %v166 = vunpack.c.l.b16 %v22
  %v167 = vunpack.c.l.b16 %v23
  %v168 = vunpack.c.l.b16 %v24
  %v169 = vunpack.c.l.b16 %v25
  %v170 = vunpack.c.l.b16 %v26
  %v171 = vunpack.c.l.b16 %v27
  %v172 = vunpack.c.l.b16 %v28
  %v173 = vunpack.c.l.b16 %v29
  %v174 = vunpack.c.l.b16 %v30
  %v175 = vunpack.c.l.b16 %v31
  %v176 = vunpack.c.l.b16 %v32
  %v177 = vunpack.c.l.b16 %v33
  %v178 = vunpack.c.l.b16 %v34
  %v179 = vunpack.c.l.b16 %v35
  %v180 = vunpack.c.l.b16 %v36
  %v181 = vunpack.c.l.b16 %v37
  %v182 = vunpack.c.l.b16 %v38
  %v183 = vunpack.c.l.b16 %v39
  %v184 = vunpack.c.l.b16 %v40
  %v185 = vunpack.c.l.b16 %v41
  %v186 = vunpack.c.l.b16 %v42
  %v187 = vunpack.c.l.b16 %v43
  %v188 = vunpack.c.l.b16 %v44
  %v189 = vunpack.c.l.b16 %v45
  %v190 = vunpack.c.l.b16 %v46
  %v191 = vunpack.c.l.b16 %v47
  %v192 = vunpack.c.l.b16 %v48
  %v193 = vunpack.c.l.b16 %v49
  %v194 = vunpack.c.l.b16 %v50
  %v195 = vunpack.c.l.b16 %v51
  %v196 = vunpack.c.l.b16 %v52
  %v197 = vunpack.c.l.b16 %v53
  %v198 = vunpack.c.l.b16 %v54
  %v199 = vunpack.c.l.b16 %v55
  %v200 = vunpack.c.l.b16 %v56
  %v201 = vunpack.c.l.b16 %v57
  %v202 = vunpack.c.l.b16 %v58
  %v203 = vunpack.c.l.b16 %v59
  %v204 = vunpack.c.l.b16 %v60
  %v205 = vunpack.c.l.b16 %v61
  %v206 = vunpack.c.l.b16 %v62
  %v207 = vunpack.c.l.b16 %v63
  %v208 = vunpack.c.l.b16 %v64
  %v209 = vunpack.c.l.b16 %v65
  %v210 = vunpack.c.l.b16 %v66
  %v211 = vunpack.c.l.b16 %v67
  %v212 = vunpack.c.l.b16 %v68
  %v213 = vunpack.c.l.b16 %v69
  %v214 = vunpack.c.l.b16 %v70
  %v215 = vunpack.c.l.b16 %v71
  %v216 = vunpack.c.l.b16 %v72
  %v217 = vunpack.c.l.b16 %v73
  %v218 = vunpack.c.l.b16 %v74
  %v219 = vunpack.c.l.b16 %v75
  %v220 = vunpack.c.l.b16 %v76
  %v221 = vunpack.c.l.b16 %v77
  %v222 = vunpack.c.l.b16 %v78
  %v223 = vpack.c.b16 %v160, %v159
  %v224 = vpack.c.b16 %v162, %v161
  %v225 = vpack.c.b16 %v164, %v163
  %v226 = vpack.c.b16 %v166, %v165
  %v227 = vpack.c.b16 %v168, %v167
  %v228 = vpack.c.b16 %v170, %v169
  %v229 = vpack.c.b16 %v172, %v171
  %v230 = vpack.c.b16 %v174, %v173
  %v231 = vpack.c.b16 %v176, %v175
  %v232 = vpack.c.b16 %v178, %v177
  %v233 = vpack.c.b16 %v180, %v179
  %v234 = vpack.c.b16 %v182, %v181
  %v235 = vpack.c.b16 %v184, %v183
  %v236 = vpack.c.b16 %v186, %v185
  %v237 = vpack.c.b16 %v188, %v187
  %v238 = vpack.c.b16 %v190, %v189
  %v239 = vpack.c.b16 %v192, %v191
  %v240 = vpack.c.b16 %v194, %v193
  %v241 = vpack.c.b16 %v196, %v195
  %v242 = vpack.c.b16 %v198, %v197
  %v243 = vpack.c.b16 %v200, %v199
  %v244 = vpack.c.b16 %v202, %v201
  %v245 = vpack.c.b16 %v204, %v203
  %v246 = vpack.c.b16 %v206, %v205
  %v247 = vpack.c.b16 %v208, %v207
  %v248 = vpack.c.b16 %v210, %v209
  %v249 = vpack.c.b16 %v212, %v211
  %v250 = vpack.c.b16 %v214, %v213
  %v251 = vpack.c.b16 %v216, %v215
  %v252 = vpack.c.b16 %v218, %v217
  %v253 = vpack.c.b16 %v220, %v219
  %v254 = vpack.c.b16 %v222, %v221
  %v303 = vunpack.c.l.b16 %v79
  %v304 = vunpack.c.l.b16 %v80
  %v305 = vunpack.c.l.b16 %v81
  %v306 = vunpack.c.l.b16 %v82
  %v307 = vunpack.c.l.b16 %v83
  %v308 = vunpack.c.l.b16 %v84
  %v309 = vunpack.c.l.b16 %v85
  %v310 = vunpack.c.l.b16 %v86
  %v311 = vunpack.c.l.b16 %v87
  %v312 = vunpack.c.l.b16 %v88
  %v313 = vunpack.c.l.b16 %v89
  %v314 = vunpack.c.l.b16 %v90
  %v315 = vunpack.c.l.b16 %v91
  %v316 = vunpack.c.l.b16 %v92
  %v317 = vunpack.c.l.b16 %v93
  %v318 = vunpack.c.l.b16 %v94
  %v319 = vpack.c.b16 %v304, %v303
  %v320 = vpack.c.b16 %v306, %v305
  %v321 = vpack.c.b16 %v308, %v307
  %v322 = vpack.c.b16 %v310, %v309
  %v323 = vpack.c.b16 %v312, %v311
  %v324 = vpack.c.b16 %v314, %v313
  %v325 = vpack.c.b16 %v316, %v315
  %v326 = vpack.c.b16 %v318, %v317
  %335 = vmatprep.subr.bf16.mxu0 0
  %336 = vmatpush1.bf16.msra.mxu0 %v326
  %337 = vmatprep.subr.bf16.mxu0 0
  %338 = vmatpush1.bf16.msra.mxu0 %v325
  %339 = vmatprep.subr.bf16.mxu0 0
  %340 = vmatpush1.bf16.msra.mxu0 %v324
  %341 = vmatprep.subr.bf16.mxu0 0
  %342 = vmatpush1.bf16.msra.mxu0 %v323
  %343 = vmatprep.subr.bf16.mxu0 0
  %344 = vmatpush1.bf16.msra.mxu0 %v322
  %345 = vmatprep.subr.bf16.mxu0 0
  %346 = vmatpush1.bf16.msra.mxu0 %v321
  %347 = vmatprep.subr.bf16.mxu0 0
  %348 = vmatpush1.bf16.msra.mxu0 %v320
  %349 = vmatprep.subr.bf16.mxu0 0
  %350 = vmatpush1.bf16.msra.mxu0 %v319
  %351 = vmatprep.subr.bf16.mxu0 0
  %352 = vmatpush2.bf16.msra.mxu0 0
  %353 = vmatprep.subr.bf16.mxu0 0
  %354 = vmatpush2.bf16.msra.mxu0 0
  %355 = vmatprep.subr.bf16.mxu0 0
  %356 = vmatpush2.bf16.msra.mxu0 0
  %357 = vmatprep.subr.bf16.mxu0 0
  %358 = vmatpush2.bf16.msra.mxu0 0
  %359 = vmatprep.subr.bf16.mxu0 0
  %360 = vmatpush2.bf16.msra.mxu0 0
  %361 = vmatprep.subr.bf16.mxu0 0
  %362 = vmatpush2.bf16.msra.mxu0 0
  %363 = vmatprep.subr.bf16.mxu0 0
  %364 = vmatpush2.bf16.msra.mxu0 0
  %365 = vmatprep.subr.bf16.mxu0 0
  %366 = vmatpush2.bf16.msra.mxu0 0
  %367 = vmatprep.mubr.bf16.mxu0 0
  %368 = vmatmul.mubr.bf16.gmra.mxu0 %v223
  %v369 = vpop.f32.mrf.mxu0
  %v370 = vadd.f32 0.0, %v369
  %v371 = vpop.f32.mrf.mxu0
  %v372 = vpop.f32.mrf.mxu0
  %v373 = vadd.f32 0.0, %v372
  %v374 = vpop.f32.mrf.mxu0
  %375 = vmatprep.mubr.bf16.mxu0 0
  %376 = vmatmul.mubr.bf16.gmra.mxu0 %v224
  %v377 = vpop.f32.mrf.mxu0
  %v378 = vadd.f32 0.0, %v377
  %v379 = vpop.f32.mrf.mxu0
  %v380 = vpop.f32.mrf.mxu0
  %v381 = vadd.f32 0.0, %v380
  %v382 = vpop.f32.mrf.mxu0
  %383 = vmatprep.mubr.bf16.mxu0 0
  %384 = vmatmul.mubr.bf16.gmra.mxu0 %v225
  %v385 = vpop.f32.mrf.mxu0
  %v386 = vadd.f32 0.0, %v385
  %v387 = vpop.f32.mrf.mxu0
  %v388 = vpop.f32.mrf.mxu0
  %v389 = vadd.f32 0.0, %v388
  %v390 = vpop.f32.mrf.mxu0
  %391 = vmatprep.mubr.bf16.mxu0 0
  %392 = vmatmul.mubr.bf16.gmra.mxu0 %v226
  %v393 = vpop.f32.mrf.mxu0
  %v394 = vadd.f32 0.0, %v393
  %v395 = vpop.f32.mrf.mxu0
  %v396 = vpop.f32.mrf.mxu0
  %v397 = vadd.f32 0.0, %v396
  %v398 = vpop.f32.mrf.mxu0
  %399 = vmatprep.mubr.bf16.mxu0 0
  %400 = vmatmul.mubr.bf16.gmra.mxu0 %v227
  %v401 = vpop.f32.mrf.mxu0
  %v402 = vadd.f32 0.0, %v401
  %v403 = vpop.f32.mrf.mxu0
  %v404 = vpop.f32.mrf.mxu0
  %v405 = vadd.f32 0.0, %v404
  %v406 = vpop.f32.mrf.mxu0
  %407 = vmatprep.mubr.bf16.mxu0 0
  %408 = vmatmul.mubr.bf16.gmra.mxu0 %v228
  %v409 = vpop.f32.mrf.mxu0
  %v410 = vadd.f32 0.0, %v409
  %v411 = vpop.f32.mrf.mxu0
  %v412 = vpop.f32.mrf.mxu0
  %v413 = vadd.f32 0.0, %v412
  %v414 = vpop.f32.mrf.mxu0
  %415 = vmatprep.mubr.bf16.mxu0 0
  %416 = vmatmul.mubr.bf16.gmra.mxu0 %v229
  %v417 = vpop.f32.mrf.mxu0
  %v418 = vadd.f32 0.0, %v417
  %v419 = vpop.f32.mrf.mxu0
  %v420 = vpop.f32.mrf.mxu0
  %v421 = vadd.f32 0.0, %v420
  %v422 = vpop.f32.mrf.mxu0
  %423 = vmatprep.mubr.bf16.mxu0 0
  %424 = vmatmul.mubr.bf16.gmra.mxu0 %v230
  %v425 = vpop.f32.mrf.mxu0
  %v426 = vadd.f32 0.0, %v425
  %v427 = vpop.f32.mrf.mxu0
  %v428 = vpop.f32.mrf.mxu0
  %v429 = vadd.f32 0.0, %v428
  %v430 = vpop.f32.mrf.mxu0
  %431 = vmatprep.mubr.bf16.mxu0 0
  %432 = vmatmul.mubr.bf16.gmra.mxu0 %v231
  %v433 = vpop.f32.mrf.mxu0
  %v434 = vadd.f32 0.0, %v433
  %v435 = vpop.f32.mrf.mxu0
  %v436 = vpop.f32.mrf.mxu0
  %v437 = vadd.f32 0.0, %v436
  %v438 = vpop.f32.mrf.mxu0
  %439 = vmatprep.mubr.bf16.mxu0 0
  %440 = vmatmul.mubr.bf16.gmra.mxu0 %v232
  %v441 = vpop.f32.mrf.mxu0
  %v442 = vadd.f32 0.0, %v441
  %v443 = vpop.f32.mrf.mxu0
  %v444 = vpop.f32.mrf.mxu0
  %v445 = vadd.f32 0.0, %v444
  %v446 = vpop.f32.mrf.mxu0
  %447 = vmatprep.mubr.bf16.mxu0 0
  %448 = vmatmul.mubr.bf16.gmra.mxu0 %v233
  %v449 = vpop.f32.mrf.mxu0
  %v450 = vadd.f32 0.0, %v449
  %v451 = vpop.f32.mrf.mxu0
  %v452 = vpop.f32.mrf.mxu0
  %v453 = vadd.f32 0.0, %v452
  %v454 = vpop.f32.mrf.mxu0
  %455 = vmatprep.mubr.bf16.mxu0 0
  %456 = vmatmul.mubr.bf16.gmra.mxu0 %v234
  %v457 = vpop.f32.mrf.mxu0
  %v458 = vadd.f32 0.0, %v457
  %v459 = vpop.f32.mrf.mxu0
  %v460 = vpop.f32.mrf.mxu0
  %v461 = vadd.f32 0.0, %v460
  %v462 = vpop.f32.mrf.mxu0
  %463 = vmatprep.mubr.bf16.mxu0 0
  %464 = vmatmul.mubr.bf16.gmra.mxu0 %v235
  %v465 = vpop.f32.mrf.mxu0
  %v466 = vadd.f32 0.0, %v465
  %v467 = vpop.f32.mrf.mxu0
  %v468 = vpop.f32.mrf.mxu0
  %v469 = vadd.f32 0.0, %v468
  %v470 = vpop.f32.mrf.mxu0
  %471 = vmatprep.mubr.bf16.mxu0 0
  %472 = vmatmul.mubr.bf16.gmra.mxu0 %v236
  %v473 = vpop.f32.mrf.mxu0
  %v474 = vadd.f32 0.0, %v473
  %v475 = vpop.f32.mrf.mxu0
  %v476 = vpop.f32.mrf.mxu0
  %v477 = vadd.f32 0.0, %v476
  %v478 = vpop.f32.mrf.mxu0
  %479 = vmatprep.mubr.bf16.mxu0 0
  %480 = vmatmul.mubr.bf16.gmra.mxu0 %v237
  %v481 = vpop.f32.mrf.mxu0
  %v482 = vadd.f32 0.0, %v481
  %v483 = vpop.f32.mrf.mxu0
  %v484 = vpop.f32.mrf.mxu0
  %v485 = vadd.f32 0.0, %v484
  %v486 = vpop.f32.mrf.mxu0
  %487 = vmatprep.mubr.bf16.mxu0 0
  %488 = vmatmul.mubr.bf16.gmra.mxu0 %v238
  %v489 = vpop.f32.mrf.mxu0
  %v490 = vadd.f32 0.0, %v489
  %v491 = vpop.f32.mrf.mxu0
  %v492 = vpop.f32.mrf.mxu0
  %v493 = vadd.f32 0.0, %v492
  %v494 = vpop.f32.mrf.mxu0
  %495 = vmatprep.mubr.bf16.mxu0 0
  %496 = vmatmul.mubr.bf16.gmra.mxu0 %v239
  %v497 = vpop.f32.mrf.mxu0
  %v498 = vadd.f32 0.0, %v497
  %v499 = vpop.f32.mrf.mxu0
  %v500 = vpop.f32.mrf.mxu0
  %v501 = vadd.f32 0.0, %v500
  %v502 = vpop.f32.mrf.mxu0
  %503 = vmatprep.mubr.bf16.mxu0 0
  %504 = vmatmul.mubr.bf16.gmra.mxu0 %v240
  %v505 = vpop.f32.mrf.mxu0
  %v506 = vadd.f32 0.0, %v505
  %v507 = vpop.f32.mrf.mxu0
  %v508 = vpop.f32.mrf.mxu0
  %v509 = vadd.f32 0.0, %v508
  %v510 = vpop.f32.mrf.mxu0
  %511 = vmatprep.mubr.bf16.mxu0 0
  %512 = vmatmul.mubr.bf16.gmra.mxu0 %v241
  %v513 = vpop.f32.mrf.mxu0
  %v514 = vadd.f32 0.0, %v513
  %v515 = vpop.f32.mrf.mxu0
  %v516 = vpop.f32.mrf.mxu0
  %v517 = vadd.f32 0.0, %v516
  %v518 = vpop.f32.mrf.mxu0
  %519 = vmatprep.mubr.bf16.mxu0 0
  %520 = vmatmul.mubr.bf16.gmra.mxu0 %v242
  %v521 = vpop.f32.mrf.mxu0
  %v522 = vadd.f32 0.0, %v521
  %v523 = vpop.f32.mrf.mxu0
  %v524 = vpop.f32.mrf.mxu0
  %v525 = vadd.f32 0.0, %v524
  %v526 = vpop.f32.mrf.mxu0
  %527 = vmatprep.mubr.bf16.mxu0 0
  %528 = vmatmul.mubr.bf16.gmra.mxu0 %v243
  %v529 = vpop.f32.mrf.mxu0
  %v530 = vadd.f32 0.0, %v529
  %v531 = vpop.f32.mrf.mxu0
  %v532 = vpop.f32.mrf.mxu0
  %v533 = vadd.f32 0.0, %v532
  %v534 = vpop.f32.mrf.mxu0
  %535 = vmatprep.mubr.bf16.mxu0 0
  %536 = vmatmul.mubr.bf16.gmra.mxu0 %v244
  %v537 = vpop.f32.mrf.mxu0
  %v538 = vadd.f32 0.0, %v537
  %v539 = vpop.f32.mrf.mxu0
  %v540 = vpop.f32.mrf.mxu0
  %v541 = vadd.f32 0.0, %v540
  %v542 = vpop.f32.mrf.mxu0
  %543 = vmatprep.mubr.bf16.mxu0 0
  %544 = vmatmul.mubr.bf16.gmra.mxu0 %v245
  %v545 = vpop.f32.mrf.mxu0
  %v546 = vadd.f32 0.0, %v545
  %v547 = vpop.f32.mrf.mxu0
  %v548 = vpop.f32.mrf.mxu0
  %v549 = vadd.f32 0.0, %v548
  %v550 = vpop.f32.mrf.mxu0
  %551 = vmatprep.mubr.bf16.mxu0 0
  %552 = vmatmul.mubr.bf16.gmra.mxu0 %v246
  %v553 = vpop.f32.mrf.mxu0
  %v554 = vadd.f32 0.0, %v553
  %v555 = vpop.f32.mrf.mxu0
  %v556 = vpop.f32.mrf.mxu0
  %v557 = vadd.f32 0.0, %v556
  %v558 = vpop.f32.mrf.mxu0
  %559 = vmatprep.mubr.bf16.mxu0 0
  %560 = vmatmul.mubr.bf16.gmra.mxu0 %v247
  %v561 = vpop.f32.mrf.mxu0
  %v562 = vadd.f32 0.0, %v561
  %v563 = vpop.f32.mrf.mxu0
  %v564 = vpop.f32.mrf.mxu0
  %v565 = vadd.f32 0.0, %v564
  %v566 = vpop.f32.mrf.mxu0
  %567 = vmatprep.mubr.bf16.mxu0 0
  %568 = vmatmul.mubr.bf16.gmra.mxu0 %v248
  %v569 = vpop.f32.mrf.mxu0
  %v570 = vadd.f32 0.0, %v569
  %v571 = vpop.f32.mrf.mxu0
  %v572 = vpop.f32.mrf.mxu0
  %v573 = vadd.f32 0.0, %v572
  %v574 = vpop.f32.mrf.mxu0
  %575 = vmatprep.mubr.bf16.mxu0 0
  %576 = vmatmul.mubr.bf16.gmra.mxu0 %v249
  %v577 = vpop.f32.mrf.mxu0
  %v578 = vadd.f32 0.0, %v577
  %v579 = vpop.f32.mrf.mxu0
  %v580 = vpop.f32.mrf.mxu0
  %v581 = vadd.f32 0.0, %v580
  %v582 = vpop.f32.mrf.mxu0
  %583 = vmatprep.mubr.bf16.mxu0 0
  %584 = vmatmul.mubr.bf16.gmra.mxu0 %v250
  %v585 = vpop.f32.mrf.mxu0
  %v586 = vadd.f32 0.0, %v585
  %v587 = vpop.f32.mrf.mxu0
  %v588 = vpop.f32.mrf.mxu0
  %v589 = vadd.f32 0.0, %v588
  %v590 = vpop.f32.mrf.mxu0
  %591 = vmatprep.mubr.bf16.mxu0 0
  %592 = vmatmul.mubr.bf16.gmra.mxu0 %v251
  %v593 = vpop.f32.mrf.mxu0
  %v594 = vadd.f32 0.0, %v593
  %v595 = vpop.f32.mrf.mxu0
  %v596 = vpop.f32.mrf.mxu0
  %v597 = vadd.f32 0.0, %v596
  %v598 = vpop.f32.mrf.mxu0
  %599 = vmatprep.mubr.bf16.mxu0 0
  %600 = vmatmul.mubr.bf16.gmra.mxu0 %v252
  %v601 = vpop.f32.mrf.mxu0
  %v602 = vadd.f32 0.0, %v601
  %v603 = vpop.f32.mrf.mxu0
  %v604 = vpop.f32.mrf.mxu0
  %v605 = vadd.f32 0.0, %v604
  %v606 = vpop.f32.mrf.mxu0
  %607 = vmatprep.mubr.bf16.mxu0 0
  %608 = vmatmul.mubr.bf16.gmra.mxu0 %v253
  %v609 = vpop.f32.mrf.mxu0
  %v610 = vadd.f32 0.0, %v609
  %v611 = vpop.f32.mrf.mxu0
  %v612 = vpop.f32.mrf.mxu0
  %v613 = vadd.f32 0.0, %v612
  %v614 = vpop.f32.mrf.mxu0
  %615 = vmatprep.mubr.bf16.mxu0 0
  %616 = vmatmul.mubr.bf16.gmra.mxu0 %v254
  %v617 = vpop.f32.mrf.mxu0
  %v618 = vadd.f32 0.0, %v617
  %v619 = vpop.f32.mrf.mxu0
  %v620 = vpop.f32.mrf.mxu0
  %v621 = vadd.f32 0.0, %v620
  %v622 = vpop.f32.mrf.mxu0
  %623 = vdwg.mxu0
  %624 = vst [vmem:[%s2] sm:$0xff] %v370
  %625 = vst [vmem:[%s2 + $0x8] sm:$0xff] %v373
  %626 = vst [vmem:[%s2 + $0x10] sm:$0xff] %v378
  %627 = vst [vmem:[%s2 + $0x18] sm:$0xff] %v381
  %628 = vst [vmem:[%s2 + $0x20] sm:$0xff] %v386
  %629 = vst [vmem:[%s2 + $0x28] sm:$0xff] %v389
  %630 = vst [vmem:[%s2 + $0x30] sm:$0xff] %v394
  %631 = vst [vmem:[%s2 + $0x38] sm:$0xff] %v397
  %632 = vst [vmem:[%s2 + $0x40] sm:$0xff] %v402
  %633 = vst [vmem:[%s2 + $0x48] sm:$0xff] %v405
  %634 = vst [vmem:[%s2 + $0x50] sm:$0xff] %v410
  %635 = vst [vmem:[%s2 + $0x58] sm:$0xff] %v413
  %636 = vst [vmem:[%s2 + $0x60] sm:$0xff] %v418
  %637 = vst [vmem:[%s2 + $0x68] sm:$0xff] %v421
  %638 = vst [vmem:[%s2 + $0x70] sm:$0xff] %v426
  %639 = vst [vmem:[%s2 + $0x78] sm:$0xff] %v429
  %640 = vst [vmem:[%s2 + $0x80] sm:$0xff] %v434
  %641 = vst [vmem:[%s2 + $0x88] sm:$0xff] %v437
  %642 = vst [vmem:[%s2 + $0x90] sm:$0xff] %v442
  %643 = vst [vmem:[%s2 + $0x98] sm:$0xff] %v445
  %644 = vst [vmem:[%s2 + $0xa0] sm:$0xff] %v450
  %645 = vst [vmem:[%s2 + $0xa8] sm:$0xff] %v453
  %646 = vst [vmem:[%s2 + $0xb0] sm:$0xff] %v458
  %647 = vst [vmem:[%s2 + $0xb8] sm:$0xff] %v461
  %648 = vst [vmem:[%s2 + $0xc0] sm:$0xff] %v466
  %649 = vst [vmem:[%s2 + $0xc8] sm:$0xff] %v469
  %650 = vst [vmem:[%s2 + $0xd0] sm:$0xff] %v474
  %651 = vst [vmem:[%s2 + $0xd8] sm:$0xff] %v477
  %652 = vst [vmem:[%s2 + $0xe0] sm:$0xff] %v482
  %653 = vst [vmem:[%s2 + $0xe8] sm:$0xff] %v485
  %654 = vst [vmem:[%s2 + $0xf0] sm:$0xff] %v490
  %655 = vst [vmem:[%s2 + $0xf8] sm:$0xff] %v493
  %656 = vst [vmem:[%s2 + $0x100] sm:$0xff] %v498
  %657 = vst [vmem:[%s2 + $0x108] sm:$0xff] %v501
  %658 = vst [vmem:[%s2 + $0x110] sm:$0xff] %v506
  %659 = vst [vmem:[%s2 + $0x118] sm:$0xff] %v509
  %660 = vst [vmem:[%s2 + $0x120] sm:$0xff] %v514
  %661 = vst [vmem:[%s2 + $0x128] sm:$0xff] %v517
  %662 = vst [vmem:[%s2 + $0x130] sm:$0xff] %v522
  %663 = vst [vmem:[%s2 + $0x138] sm:$0xff] %v525
  %664 = vst [vmem:[%s2 + $0x140] sm:$0xff] %v530
  %665 = vst [vmem:[%s2 + $0x148] sm:$0xff] %v533
  %666 = vst [vmem:[%s2 + $0x150] sm:$0xff] %v538
  %667 = vst [vmem:[%s2 + $0x158] sm:$0xff] %v541
  %668 = vst [vmem:[%s2 + $0x160] sm:$0xff] %v546
  %669 = vst [vmem:[%s2 + $0x168] sm:$0xff] %v549
  %670 = vst [vmem:[%s2 + $0x170] sm:$0xff] %v554
  %671 = vst [vmem:[%s2 + $0x178] sm:$0xff] %v557
  %672 = vst [vmem:[%s2 + $0x180] sm:$0xff] %v562
  %673 = vst [vmem:[%s2 + $0x188] sm:$0xff] %v565
  %674 = vst [vmem:[%s2 + $0x190] sm:$0xff] %v570
  %675 = vst [vmem:[%s2 + $0x198] sm:$0xff] %v573
  %676 = vst [vmem:[%s2 + $0x1a0] sm:$0xff] %v578
  %677 = vst [vmem:[%s2 + $0x1a8] sm:$0xff] %v581
  %678 = vst [vmem:[%s2 + $0x1b0] sm:$0xff] %v586
  %679 = vst [vmem:[%s2 + $0x1b8] sm:$0xff] %v589
  %680 = vst [vmem:[%s2 + $0x1c0] sm:$0xff] %v594
  %681 = vst [vmem:[%s2 + $0x1c8] sm:$0xff] %v597
  %682 = vst [vmem:[%s2 + $0x1d0] sm:$0xff] %v602
  %683 = vst [vmem:[%s2 + $0x1d8] sm:$0xff] %v605
  %684 = vst [vmem:[%s2 + $0x1e0] sm:$0xff] %v610
  %685 = vst [vmem:[%s2 + $0x1e8] sm:$0xff] %v613
  %686 = vst [vmem:[%s2 + $0x1f0] sm:$0xff] %v618
  %687 = vst [vmem:[%s2 + $0x1f8] sm:$0xff] %v621
  %v688 = vadd.f32 %v370, %v373
  %v689 = vadd.f32 %v688, %v378
  %v690 = vadd.f32 %v689, %v381
  %v691 = vadd.f32 %v690, %v386
  %v692 = vadd.f32 %v691, %v389
  %v693 = vadd.f32 %v692, %v394
  %v694 = vadd.f32 %v693, %v397
  %v695 = vadd.f32 %v694, %v402
  %v696 = vadd.f32 %v695, %v405
  %v697 = vadd.f32 %v696, %v410
  %v698 = vadd.f32 %v697, %v413
  %v699 = vadd.f32 %v698, %v418
  %v700 = vadd.f32 %v699, %v421
  %v701 = vadd.f32 %v700, %v426
  %v702 = vadd.f32 %v701, %v429
  %v703 = vadd.f32 %v702, %v434
  %v704 = vadd.f32 %v703, %v437
  %v705 = vadd.f32 %v704, %v442
  %v706 = vadd.f32 %v705, %v445
  %v707 = vadd.f32 %v706, %v450
  %v708 = vadd.f32 %v707, %v453
  %v709 = vadd.f32 %v708, %v458
  %v710 = vadd.f32 %v709, %v461
  %v711 = vadd.f32 %v710, %v466
  %v712 = vadd.f32 %v711, %v469
  %v713 = vadd.f32 %v712, %v474
  %v714 = vadd.f32 %v713, %v477
  %v715 = vadd.f32 %v714, %v482
  %v716 = vadd.f32 %v715, %v485
  %v717 = vadd.f32 %v716, %v490
  %v718 = vadd.f32 %v717, %v493
  %v719 = vadd.f32 %v718, %v498
  %v720 = vadd.f32 %v719, %v501
  %v721 = vadd.f32 %v720, %v506
  %v722 = vadd.f32 %v721, %v509
  %v723 = vadd.f32 %v722, %v514
  %v724 = vadd.f32 %v723, %v517
  %v725 = vadd.f32 %v724, %v522
  %v726 = vadd.f32 %v725, %v525
  %v727 = vadd.f32 %v726, %v530
  %v728 = vadd.f32 %v727, %v533
  %v729 = vadd.f32 %v728, %v538
  %v730 = vadd.f32 %v729, %v541
  %v731 = vadd.f32 %v730, %v546
  %v732 = vadd.f32 %v731, %v549
  %v733 = vadd.f32 %v732, %v554
  %v734 = vadd.f32 %v733, %v557
  %v735 = vadd.f32 %v734, %v562
  %v736 = vadd.f32 %v735, %v565
  %v737 = vadd.f32 %v736, %v570
  %v738 = vadd.f32 %v737, %v573
  %v739 = vadd.f32 %v738, %v578
  %v740 = vadd.f32 %v739, %v581
  %v741 = vadd.f32 %v740, %v586
  %v742 = vadd.f32 %v741, %v589
  %v743 = vadd.f32 %v742, %v594
  %v744 = vadd.f32 %v743, %v597
  %v745 = vadd.f32 %v744, %v602
  %v746 = vadd.f32 %v745, %v605
  %v747 = vadd.f32 %v746, %v610
  %v748 = vadd.f32 %v747, %v613
  %v749 = vadd.f32 %v748, %v618
  %v750 = vadd.f32 %v749, %v621
  %751 = vst [vmem:[%s3] sm:$0xff] %v750
  %v752 = vmul.f32 %v370, %v370
  %v753 = vmul.f32 %v373, %v373
  %v754 = vmul.f32 %v378, %v378
  %v755 = vmul.f32 %v381, %v381
  %v756 = vmul.f32 %v386, %v386
  %v757 = vmul.f32 %v389, %v389
  %v758 = vmul.f32 %v394, %v394
  %v759 = vmul.f32 %v397, %v397
  %v760 = vmul.f32 %v402, %v402
  %v761 = vmul.f32 %v405, %v405
  %v762 = vmul.f32 %v410, %v410
  %v763 = vmul.f32 %v413, %v413
  %v764 = vmul.f32 %v418, %v418
  %v765 = vmul.f32 %v421, %v421
  %v766 = vmul.f32 %v426, %v426
  %v767 = vmul.f32 %v429, %v429
  %v768 = vmul.f32 %v434, %v434
  %v769 = vmul.f32 %v437, %v437
  %v770 = vmul.f32 %v442, %v442
  %v771 = vmul.f32 %v445, %v445
  %v772 = vmul.f32 %v450, %v450
  %v773 = vmul.f32 %v453, %v453
  %v774 = vmul.f32 %v458, %v458
  %v775 = vmul.f32 %v461, %v461
  %v776 = vmul.f32 %v466, %v466
  %v777 = vmul.f32 %v469, %v469
  %v778 = vmul.f32 %v474, %v474
  %v779 = vmul.f32 %v477, %v477
  %v780 = vmul.f32 %v482, %v482
  %v781 = vmul.f32 %v485, %v485
  %v782 = vmul.f32 %v490, %v490
  %v783 = vmul.f32 %v493, %v493
  %v784 = vmul.f32 %v498, %v498
  %v785 = vmul.f32 %v501, %v501
  %v786 = vmul.f32 %v506, %v506
  %v787 = vmul.f32 %v509, %v509
  %v788 = vmul.f32 %v514, %v514
  %v789 = vmul.f32 %v517, %v517
  %v790 = vmul.f32 %v522, %v522
  %v791 = vmul.f32 %v525, %v525
  %v792 = vmul.f32 %v530, %v530
  %v793 = vmul.f32 %v533, %v533
  %v794 = vmul.f32 %v538, %v538
  %v795 = vmul.f32 %v541, %v541
  %v796 = vmul.f32 %v546, %v546
  %v797 = vmul.f32 %v549, %v549
  %v798 = vmul.f32 %v554, %v554
  %v799 = vmul.f32 %v557, %v557
  %v800 = vmul.f32 %v562, %v562
  %v801 = vmul.f32 %v565, %v565
  %v802 = vmul.f32 %v570, %v570
  %v803 = vmul.f32 %v573, %v573
  %v804 = vmul.f32 %v578, %v578
  %v805 = vmul.f32 %v581, %v581
  %v806 = vmul.f32 %v586, %v586
  %v807 = vmul.f32 %v589, %v589
  %v808 = vmul.f32 %v594, %v594
  %v809 = vmul.f32 %v597, %v597
  %v810 = vmul.f32 %v602, %v602
  %v811 = vmul.f32 %v605, %v605
  %v812 = vmul.f32 %v610, %v610
  %v813 = vmul.f32 %v613, %v613
  %v814 = vmul.f32 %v618, %v618
  %v815 = vmul.f32 %v621, %v621
  %v816 = vadd.f32 %v752, %v753
  %v817 = vadd.f32 %v816, %v754
  %v818 = vadd.f32 %v817, %v755
  %v819 = vadd.f32 %v818, %v756
  %v820 = vadd.f32 %v819, %v757
  %v821 = vadd.f32 %v820, %v758
  %v822 = vadd.f32 %v821, %v759
  %v823 = vadd.f32 %v822, %v760
  %v824 = vadd.f32 %v823, %v761
  %v825 = vadd.f32 %v824, %v762
  %v826 = vadd.f32 %v825, %v763
  %v827 = vadd.f32 %v826, %v764
  %v828 = vadd.f32 %v827, %v765
  %v829 = vadd.f32 %v828, %v766
  %v830 = vadd.f32 %v829, %v767
  %v831 = vadd.f32 %v830, %v768
  %v832 = vadd.f32 %v831, %v769
  %v833 = vadd.f32 %v832, %v770
  %v834 = vadd.f32 %v833, %v771
  %v835 = vadd.f32 %v834, %v772
  %v836 = vadd.f32 %v835, %v773
  %v837 = vadd.f32 %v836, %v774
  %v838 = vadd.f32 %v837, %v775
  %v839 = vadd.f32 %v838, %v776
  %v840 = vadd.f32 %v839, %v777
  %v841 = vadd.f32 %v840, %v778
  %v842 = vadd.f32 %v841, %v779
  %v843 = vadd.f32 %v842, %v780
  %v844 = vadd.f32 %v843, %v781
  %v845 = vadd.f32 %v844, %v782
  %v846 = vadd.f32 %v845, %v783
  %v847 = vadd.f32 %v846, %v784
  %v848 = vadd.f32 %v847, %v785
  %v849 = vadd.f32 %v848, %v786
  %v850 = vadd.f32 %v849, %v787
  %v851 = vadd.f32 %v850, %v788
  %v852 = vadd.f32 %v851, %v789
  %v853 = vadd.f32 %v852, %v790
  %v854 = vadd.f32 %v853, %v791
  %v855 = vadd.f32 %v854, %v792
  %v856 = vadd.f32 %v855, %v793
  %v857 = vadd.f32 %v856, %v794
  %v858 = vadd.f32 %v857, %v795
  %v859 = vadd.f32 %v858, %v796
  %v860 = vadd.f32 %v859, %v797
  %v861 = vadd.f32 %v860, %v798
  %v862 = vadd.f32 %v861, %v799
  %v863 = vadd.f32 %v862, %v800
  %v864 = vadd.f32 %v863, %v801
  %v865 = vadd.f32 %v864, %v802
  %v866 = vadd.f32 %v865, %v803
  %v867 = vadd.f32 %v866, %v804
  %v868 = vadd.f32 %v867, %v805
  %v869 = vadd.f32 %v868, %v806
  %v870 = vadd.f32 %v869, %v807
  %v871 = vadd.f32 %v870, %v808
  %v872 = vadd.f32 %v871, %v809
  %v873 = vadd.f32 %v872, %v810
  %v874 = vadd.f32 %v873, %v811
  %v875 = vadd.f32 %v874, %v812
  %v876 = vadd.f32 %v875, %v813
  %v877 = vadd.f32 %v876, %v814
  %v878 = vadd.f32 %v877, %v815
  %879 = vst [vmem:[%s4] sm:$0xff] %v878
  // Predicated region
  $region10: #{conv_bn.2} parent=0 // pred_check
    _
  $region11: #{conv_bn.2} parent=0 // pred_check_branch
    %881 = sbr.rel (0) target = $region13
  $region12: #{conv_bn.2} parent=0 // pred_region
    _
  $region13: #{conv_bn.2} parent=0 // pred_fallthru
    _
  // Predicated region
  $region14: #{conv_bn.2} parent=0 // pred_check
    _
  $region15: #{conv_bn.2} parent=0 // pred_check_branch
    %883 = sbr.rel (0) target = $region17
  $region16: #{conv_bn.2} parent=0 // pred_region
    _
  $region17: #{conv_bn.2} parent=0 // pred_fallthru
    _
  // Predicated region
  $region18: #{conv_bn.2} parent=0 // pred_check
    _
  $region19: #{conv_bn.2} parent=0 // pred_check_branch
    %885 = sbr.rel (0) target = $region21
  $region20: #{conv_bn.2} parent=0 // pred_region
    _
  $region21: #{conv_bn.2} parent=0 // pred_fallthru
    _
  // Predicated region
  $region22: #{conv_bn.2} parent=0 // pred_check
    _
  $region23: #{conv_bn.2} parent=0 // pred_check_branch
    %887 = sbr.rel (0) target = $region25
  $region24: #{conv_bn.2} parent=0 // pred_region
    _
  $region25: #{conv_bn.2} parent=0 // pred_fallthru
    _
  // Predicated region
  $region26: #{conv_bn.2} parent=0 // pred_check
    _
  $region27: #{conv_bn.2} parent=0 // pred_check_branch
    %889 = sbr.rel (0) target = $region29
  $region28: #{conv_bn.2} parent=0 // pred_region
    _
  $region29: #{conv_bn.2} parent=0 // pred_fallthru
    _
  // Predicated region
  $region30: #{conv_bn.2} parent=0 // pred_check
    _
  $region31: #{conv_bn.2} parent=0 // pred_check_branch
    %891 = sbr.rel (0) target = $region33
  $region32: #{conv_bn.2} parent=0 // pred_region
    _
  $region33: #{conv_bn.2} parent=0 // pred_fallthru
    _

</llo_original>
